<compile_context>
chip_gen: v6e
topology: v6e:2x2x1
jax: 0.10.0
libtpu: 0.0.40
codegen_flags: <defaults>
</compile_context>

<pallas_src>
import jax
import jax.numpy as jnp
from jax.experimental import pallas as pl
from jax.experimental.pallas import tpu as pltpu


def _round_up(a, b):
    return ((a + b - 1) // b) * b


def _make_kernel(chunk, num_chunks):
    def kernel(x_ref, w1_ref, b1_ref, w2t_ref, b2_ref, o_ref):
        # x_ref:   (TILE_N, 1)  samples on sublanes (native PyTorch layout)
        # w1_ref:  (1, H)       Linear(1, H) weight, as a row
        # b1_ref:  (1, H)
        # w2t_ref: (H, 2)       Linear(H, 2) weight transposed -> stationary MXU side
        # b2_ref:  (1, 2)
        # o_ref:   (TILE_N, 2)  col 0 = mu, col 1 = softplus(sigma)
        w1 = w1_ref[...]
        b1 = b1_ref[...]
        w2t = w2t_ref[...]
        b2 = b2_ref[...]

        # Two-level tiling: big DMA tile, small compute chunks.  The rolled loop
        # bounds per-iteration live vregs (h is (chunk, H) <= 32 vregs); the loop
        # body is hundreds of cycles (matmul + VPU), so scalar loop overhead is
        # negligible.
        @pl.loop(0, num_chunks)
        def _chunk(ci):
            off = pl.multiple_of(ci * chunk, chunk)

            x_col = x_ref[pl.ds(off, chunk), :]                 # (chunk, 1)

            # Layer 1: K=1 contraction == broadcast FMA on the VPU, then ReLU.
            h = jnp.maximum(x_col * w1 + b1, 0.0)               # (chunk, H)

            # Layer 2 on the MXU with the tiny (H, 2) operand stationary.
            out = jnp.dot(h, w2t, preferred_element_type=jnp.float32) + b2  # (chunk, 2)

            mu = out[:, 0:1]
            sg = out[:, 1:2]
            # Softplus (PyTorch beta=1, threshold=20), sigma column only:
            #   softplus(v) = v if v > 20 else log1p(exp(v))
            sp = jnp.where(sg > 20.0, sg,
                           jnp.log1p(jnp.exp(jnp.minimum(sg, 20.0))))

            # Two static lane-sliced stores; no concat / iota-select needed.
            o_ref[pl.ds(off, chunk), 0:1] = mu
            o_ref[pl.ds(off, chunk), 1:2] = sp

    return kernel


def baseline_toy_model_1d(x, w1, b1, w2, b2, *, tile_n=4096, chunk=None):
    """Forward pass of BaselineToyModel1D.

    x : (N, 1) f32
    w1: (H, 1) f32, b1: (H,) f32   -- Linear(1, H) params (PyTorch layout)
    w2: (2, H) f32, b2: (2,) f32   -- Linear(H, 2) params (PyTorch layout)
    returns (N, 2) f32: [mu, softplus(sigma)]
    """
    x = jnp.asarray(x, jnp.float32)
    if x.ndim == 1:
        x = x.reshape(-1, 1)
    N = x.shape[0]
    H = w1.shape[0]

    # Compute-chunk size (batch rows per inner iteration).  256 keeps the
    # (chunk, H) hidden activation at <= 32 vregs for H <= 128.
    if chunk is None:
        chunk = 256 if H <= 128 else 128
    chunk = max(8, (chunk // 8) * 8)

    # DMA tile: a multiple of `chunk`, capped at the (chunk-padded) batch so tiny
    # problems run as a single grid step.  For large N this yields many grid
    # steps, which the "parallel" axis spreads over both TensorCores on v7x.
    tile_n = max(chunk, (int(tile_n) // chunk) * chunk)
    tile_n = min(tile_n, _round_up(N, chunk))
    num_chunks = tile_n // chunk
    grid = (pl.cdiv(N, tile_n),)

    # Tiny (H-sized) parameter re-layouts; all free or negligible one-time ops.
    w1_row = jnp.asarray(w1, jnp.float32).reshape(1, H)
    b1_row = jnp.asarray(b1, jnp.float32).reshape(1, H)
    w2_t = jnp.transpose(jnp.asarray(w2, jnp.float32))          # (H, 2)
    b2_row = jnp.asarray(b2, jnp.float32).reshape(1, 2)

    cost = pl.CostEstimate(
        flops=6 * H * N,                      # 2H (layer 1) + 4H (layer 2) per sample
        transcendentals=2 * N,                # exp + log1p per sample
        bytes_accessed=12 * N + 4 * (4 * H + 2),
    )

    out = pl.pallas_call(
        _make_kernel(chunk, num_chunks),
        out_shape=jax.ShapeDtypeStruct((N, 2), jnp.float32),
        grid=grid,
        in_specs=[
            pl.BlockSpec((tile_n, 1), lambda i: (i, 0)),   # x: samples on sublanes
            pl.BlockSpec((1, H), lambda i: (0, 0)),        # w1 row (resident)
            pl.BlockSpec((1, H), lambda i: (0, 0)),        # b1 row
            pl.BlockSpec((H, 2), lambda i: (0, 0)),        # w2^T (MXU stationary)
            pl.BlockSpec((1, 2), lambda i: (0, 0)),        # b2
        ],
        out_specs=pl.BlockSpec((tile_n, 2), lambda i: (i, 0)),
        compiler_params=pltpu.CompilerParams(
            dimension_semantics=("parallel",),             # batch tiles independent
            vmem_limit_bytes=32 * 1024 * 1024,             # headroom for large tiles
        ),
        cost_estimate=cost,
    )(x, w1_row, b1_row, w2_t, b2_row)
    return out


def init_params(key, hidden_dim):
    """Kaiming-normal (fan_in, relu) weights as in BaselineToyModel1D.init_weights;
    biases keep PyTorch nn.Linear's default U(-1/sqrt(fan_in), 1/sqrt(fan_in))."""
    k1, k2, k3, k4 = jax.random.split(key, 4)
    w1 = jax.random.normal(k1, (hidden_dim, 1), jnp.float32) * jnp.sqrt(2.0 / 1.0)
    b1 = jax.random.uniform(k2, (hidden_dim,), jnp.float32, -1.0, 1.0)
    w2 = jax.random.normal(k3, (2, hidden_dim), jnp.float32) * jnp.sqrt(2.0 / hidden_dim)
    bound2 = 1.0 / float(hidden_dim) ** 0.5
    b2 = jax.random.uniform(k4, (2,), jnp.float32, -bound2, bound2)
    return w1, b1, w2, b2


def _reference(x, w1, b1, w2, b2):
    h = jnp.maximum(x @ w1.T + b1, 0.0)
    o = h @ w2.T + b2
    return jnp.concatenate([o[:, 0:1], jax.nn.softplus(o[:, 1:2])], axis=1)


if __name__ == "__main__":
    key = jax.random.PRNGKey(0)

    # Test 1: small hidden dim, batch divides the tile exactly (single grid step).
    k1, k2, k3, k4 = jax.random.split(key, 4)
    N1, H1 = 1024, 32
    x1 = jax.random.normal(k1, (N1, 1), jnp.float32)
    p1 = init_params(k2, H1)
    out1 = jax.block_until_ready(baseline_toy_model_1d(x1, *p1))
    ref1 = _reference(x1, *p1)
    assert out1.shape == (N1, 2)
    assert jnp.allclose(out1, ref1, atol=1e-5, rtol=1e-5), float(jnp.max(jnp.abs(out1 - ref1)))

    # Test 2: module-default hidden dim (100) and a ragged batch (exercises the
    # clipped last tile / partially-valid chunks).
    N2, H2 = 777, 100
    x2 = jax.random.normal(k3, (N2, 1), jnp.float32)
    p2 = init_params(k4, H2)
    out2 = jax.block_until_ready(baseline_toy_model_1d(x2, *p2))
    ref2 = _reference(x2, *p2)
    assert out2.shape == (N2, 2)
    assert jnp.allclose(out2, ref2, atol=1e-5, rtol=1e-5), float(jnp.max(jnp.abs(out2 - ref2)))

    print("KERNEL_OK")
</pallas_src>

<mosaic_0001>
module attributes {stable_mosaic.version = 11 : i64} {
  func.func @kernel(%arg0: i32, %arg1: memref<1024x1xf32, #tpu.memory_space<vmem>>, %arg2: memref<1x32xf32, #tpu.memory_space<vmem>>, %arg3: memref<1x32xf32, #tpu.memory_space<vmem>>, %arg4: memref<32x2xf32, #tpu.memory_space<vmem>>, %arg5: memref<1x2xf32, #tpu.memory_space<vmem>>, %arg6: memref<1024x2xf32, #tpu.memory_space<vmem>>) attributes {dimension_semantics = [#tpu.dimension_semantics<parallel>], iteration_bounds = array<i64: 1>, scalar_prefetch = 0 : i64, scratch_operands = 0 : i64, tpu.core_type = #tpu.core_type<tc>, window_params = [{transform_indices = @transform_0, window_bounds = array<i64: 1024, 1>}, {pipeline_mode = #tpu.pipeline_mode<synchronous>, transform_indices = @transform_1, window_bounds = array<i64: 1, 32>}, {pipeline_mode = #tpu.pipeline_mode<synchronous>, transform_indices = @transform_2, window_bounds = array<i64: 1, 32>}, {pipeline_mode = #tpu.pipeline_mode<synchronous>, transform_indices = @transform_3, window_bounds = array<i64: 32, 2>}, {pipeline_mode = #tpu.pipeline_mode<synchronous>, transform_indices = @transform_4, window_bounds = array<i64: 1, 2>}, {transform_indices = @transform_5, window_bounds = array<i64: 1024, 2>}]} {
    %c0 = arith.constant 0 : index
    %c0_0 = arith.constant 0 : index
    %0 = vector.load %arg2[%c0, %c0_0] : memref<1x32xf32, #tpu.memory_space<vmem>>, vector<1x32xf32>
    %c0_1 = arith.constant 0 : index
    %c0_2 = arith.constant 0 : index
    %1 = vector.load %arg3[%c0_1, %c0_2] : memref<1x32xf32, #tpu.memory_space<vmem>>, vector<1x32xf32>
    %c0_3 = arith.constant 0 : index
    %c0_4 = arith.constant 0 : index
    %2 = vector.load %arg4[%c0_3, %c0_4] : memref<32x2xf32, #tpu.memory_space<vmem>>, vector<32x2xf32>
    %c0_5 = arith.constant 0 : index
    %c0_6 = arith.constant 0 : index
    %3 = vector.load %arg5[%c0_5, %c0_6] : memref<1x2xf32, #tpu.memory_space<vmem>>, vector<1x2xf32>
    %c0_i32 = arith.constant 0 : i32
    %c4_i32 = arith.constant 4 : i32
    %4 = arith.addi %c0_i32, %c4_i32 : i32
    %c1_i32 = arith.constant 1 : i32
    scf.for %arg7 = %c0_i32 to %4 step %c1_i32  : i32 {
      %c1_i32_8 = arith.constant 1 : i32
      %5 = arith.muli %arg7, %c1_i32_8 : i32
      %c0_i32_9 = arith.constant 0 : i32
      %6 = arith.addi %c0_i32_9, %5 : i32
      %c256_i32 = arith.constant 256 : i32
      %7 = arith.muli %6, %c256_i32 : i32
      %8 = tpu.assume_multiple %7, 256 : i32
      %9 = arith.index_cast %8 : i32 to index
      %c0_10 = arith.constant 0 : index
      %10 = vector.load %arg1[%9, %c0_10] : memref<1024x1xf32, #tpu.memory_space<vmem>>, vector<256x1xf32>
      %11 = vector.broadcast %10 : vector<256x1xf32> to vector<256x32xf32>
      %12 = vector.broadcast %0 : vector<1x32xf32> to vector<256x32xf32>
      %13 = arith.mulf %11, %12 : vector<256x32xf32>
      %14 = vector.broadcast %1 : vector<1x32xf32> to vector<256x32xf32>
      %15 = arith.addf %13, %14 : vector<256x32xf32>
      %cst = arith.constant 0.000000e+00 : f32
      %16 = vector.broadcast %cst : f32 to vector<256x32xf32>
      %17 = arith.maximumf %15, %16 : vector<256x32xf32>
      %cst_11 = arith.constant dense<0.000000e+00> : vector<256x2xf32>
      %18 = tpu.matmul %17, %2, %cst_11 {dimension_numbers = #tpu.dot_dimension_numbers<[1], [0], [0], [1], [0, 0, 1, 1], [], []>} : vector<256x32xf32>, vector<32x2xf32>, vector<256x2xf32> -> vector<256x2xf32>
      %19 = vector.broadcast %3 : vector<1x2xf32> to vector<256x2xf32>
      %20 = arith.addf %18, %19 : vector<256x2xf32>
      %21 = vector.extract_strided_slice %20 {offsets = [0, 0], sizes = [256, 1], strides = [1, 1]} : vector<256x2xf32> to vector<256x1xf32>
      %22 = vector.extract_strided_slice %20 {offsets = [0, 1], sizes = [256, 1], strides = [1, 1]} : vector<256x2xf32> to vector<256x1xf32>
      %cst_12 = arith.constant 2.000000e+01 : f32
      %23 = vector.broadcast %cst_12 : f32 to vector<256x1xf32>
      %24 = arith.cmpf ogt, %22, %23 : vector<256x1xf32>
      %cst_13 = arith.constant 2.000000e+01 : f32
      %25 = vector.broadcast %cst_13 : f32 to vector<256x1xf32>
      %26 = arith.minimumf %22, %25 : vector<256x1xf32>
      %27 = math.exp %26 : vector<256x1xf32>
      %28 = math.log1p %27 : vector<256x1xf32>
      %29 = arith.select %24, %22, %28 : vector<256x1xi1>, vector<256x1xf32>
      %30 = arith.index_cast %8 : i32 to index
      %c0_14 = arith.constant 0 : index
      %31 = vector.load %arg6[%30, %c0_14] : memref<1024x2xf32, #tpu.memory_space<vmem>>, vector<256x1xf32>
      tpu.vector_store %arg6[%30, %c0_14], %21 {strides = array<i32>} : memref<1024x2xf32, #tpu.memory_space<vmem>>, vector<256x1xf32>,
      %32 = arith.index_cast %8 : i32 to index
      %c1 = arith.constant 1 : index
      %33 = vector.load %arg6[%32, %c1] : memref<1024x2xf32, #tpu.memory_space<vmem>>, vector<256x1xf32>
      tpu.vector_store %arg6[%32, %c1], %29 {strides = array<i32>} : memref<1024x2xf32, #tpu.memory_space<vmem>>, vector<256x1xf32>,
    }
    %c4_i32_7 = arith.constant 4 : i32
    return
  }
  func.func @transform_0(%arg0: i32) -> (i32, i32) {
    %c0_i32 = arith.constant 0 : i32
    %c0_i32_0 = arith.constant 0 : i32
    return %arg0, %c0_i32 : i32, i32
  }
  func.func @transform_1(%arg0: i32) -> (i32, i32) {
    %c0_i32 = arith.constant 0 : i32
    %c0_i32_0 = arith.constant 0 : i32
    %c0_i32_1 = arith.constant 0 : i32
    return %c0_i32, %c0_i32_0 : i32, i32
  }
  func.func @transform_2(%arg0: i32) -> (i32, i32) {
    %c0_i32 = arith.constant 0 : i32
    %c0_i32_0 = arith.constant 0 : i32
    %c0_i32_1 = arith.constant 0 : i32
    return %c0_i32, %c0_i32_0 : i32, i32
  }
  func.func @transform_3(%arg0: i32) -> (i32, i32) {
    %c0_i32 = arith.constant 0 : i32
    %c0_i32_0 = arith.constant 0 : i32
    %c0_i32_1 = arith.constant 0 : i32
    return %c0_i32, %c0_i32_0 : i32, i32
  }
  func.func @transform_4(%arg0: i32) -> (i32, i32) {
    %c0_i32 = arith.constant 0 : i32
    %c0_i32_0 = arith.constant 0 : i32
    %c0_i32_1 = arith.constant 0 : i32
    return %c0_i32, %c0_i32_0 : i32, i32
  }
  func.func @transform_5(%arg0: i32) -> (i32, i32) {
    %c0_i32 = arith.constant 0 : i32
    %c0_i32_0 = arith.constant 0 : i32
    return %arg0, %c0_i32 : i32, i32
  }
}

</mosaic_0001>

<llo_original>
// kernel: tpu_custom_call.1
$region0: #{tpu_custom_call.1}
  #allocation0 [shape = 'u32[]', space=smem, size = 0x4, offset = 0x4, fixed_abs, tag = 'smem constant byte address 0x4 - core index']
  #allocation1 [shape = 'u32[144,128]{1,0:T(1,128)}', space=vmem, size = 0x12000, scoped, tag = 'internal scratch']
  %s0 = inlined_call_operand.vmem [shape: f32[1024,1], index: 0, kind: input, shape index: {}]
  %s1 = inlined_call_operand.vmem [shape: f32[1,32], index: 1, kind: input, shape index: {}]
  %s2 = inlined_call_operand.vmem [shape: f32[1,32], index: 2, kind: input, shape index: {}]
  %s3 = inlined_call_operand.vmem [shape: f32[32,2], index: 3, kind: input, shape index: {}]
  %s4 = inlined_call_operand.vmem [shape: f32[1,2], index: 4, kind: input, shape index: {}]
  %s5 = inlined_call_operand.vmem [shape: f32[1024,2], index: 5, kind: output, shape index: {}]
  %s6 = sld [smem:[#allocation0]]
  $region37: #{tpu_custom_call.1} parent=0
    _
  %s8 = ssub.s32 1, %s6
  %s9 = scalar_select 0, %s8, %s6
  // Predicated region
  $region2: #{tpu_custom_call.1} parent=0 // pred_check
    _
  $region3: #{tpu_custom_call.1} parent=0 // pred_check_branch
    %11 = sbr.rel (0) target = $region5
  $region4: #{tpu_custom_call.1} parent=0 // pred_region
    _
  $region5: #{tpu_custom_call.1} parent=0 // pred_fallthru
    _
  // Predicated region
  $region6: #{tpu_custom_call.1} parent=0 // pred_check
    _
  $region7: #{tpu_custom_call.1} parent=0 // pred_check_branch
    %13 = sbr.rel (0) target = $region9
  $region8: #{tpu_custom_call.1} parent=0 // pred_region
    _
  $region9: #{tpu_custom_call.1} parent=0 // pred_fallthru
    _
  // Predicated region
  $region10: #{tpu_custom_call.1} parent=0 // pred_check
    _
  $region11: #{tpu_custom_call.1} parent=0 // pred_check_branch
    %15 = sbr.rel (0) target = $region13
  $region12: #{tpu_custom_call.1} parent=0 // pred_region
    _
  $region13: #{tpu_custom_call.1} parent=0 // pred_fallthru
    _
  // Predicated region
  $region14: #{tpu_custom_call.1} parent=0 // pred_check
    _
  $region15: #{tpu_custom_call.1} parent=0 // pred_check_branch
    %17 = sbr.rel (0) target = $region17
  $region16: #{tpu_custom_call.1} parent=0 // pred_region
    _
  $region17: #{tpu_custom_call.1} parent=0 // pred_fallthru
    _
  // Predicated region
  $region18: #{tpu_custom_call.1} parent=0 // pred_check
    _
  $region19: #{tpu_custom_call.1} parent=0 // pred_check_branch
    %19 = sbr.rel (0) target = $region21
  $region20: #{tpu_custom_call.1} parent=0 // pred_region
    _
  $region21: #{tpu_custom_call.1} parent=0 // pred_fallthru
    _
  %v20 = vld [vmem:[%s1] sm:$0x1]
  %v21 = vld [vmem:[%s2] sm:$0x1]
  %v22 = vld [vmem:[%s3] sm:$0xff]
  %v23 = vld [vmem:[%s3 + $0x8] sm:$0xff]
  %v24 = vld [vmem:[%s3 + $0x10] sm:$0xff]
  %v25 = vld [vmem:[%s3 + $0x18] sm:$0xff]
  %v26 = vld [vmem:[%s4] sm:$0x1]
  loop: start=0, step=1, limit=4
  $region22: #{tpu_custom_call.1} parent=0 // loop_pre_header
    _
  $region23: #{tpu_custom_call.1} parent=0 // loop_header
    %s28 = sphi 0, %s32
    %p29 = scmp.ge.s32.totalorder %s28, 4
  $region24: #{tpu_custom_call.1} parent=0 // loop_header_branch
    %31 = sbr.rel (%p29) target = $region28
  $region25: #{tpu_custom_call.1} parent=0 // loop_body
    %s33 = smul.u32 %s28, 256
    %s34 = scalar_lea.vmem %s0, %s33
    %v35 = vld [vmem:[%s34] sm:$0xff]
    %v36 = vld [vmem:[%s34 + $0x8] sm:$0xff]
    %v37 = vld [vmem:[%s34 + $0x10] sm:$0xff]
    %v38 = vld [vmem:[%s34 + $0x18] sm:$0xff]
    %v39 = vld [vmem:[%s34 + $0x20] sm:$0xff]
    %v40 = vld [vmem:[%s34 + $0x28] sm:$0xff]
    %v41 = vld [vmem:[%s34 + $0x30] sm:$0xff]
    %v42 = vld [vmem:[%s34 + $0x38] sm:$0xff]
    %v43 = vld [vmem:[%s34 + $0x40] sm:$0xff]
    %v44 = vld [vmem:[%s34 + $0x48] sm:$0xff]
    %v45 = vld [vmem:[%s34 + $0x50] sm:$0xff]
    %v46 = vld [vmem:[%s34 + $0x58] sm:$0xff]
    %v47 = vld [vmem:[%s34 + $0x60] sm:$0xff]
    %v48 = vld [vmem:[%s34 + $0x68] sm:$0xff]
    %v49 = vld [vmem:[%s34 + $0x70] sm:$0xff]
    %v50 = vld [vmem:[%s34 + $0x78] sm:$0xff]
    %v51 = vld [vmem:[%s34 + $0x80] sm:$0xff]
    %v52 = vld [vmem:[%s34 + $0x88] sm:$0xff]
    %v53 = vld [vmem:[%s34 + $0x90] sm:$0xff]
    %v54 = vld [vmem:[%s34 + $0x98] sm:$0xff]
    %v55 = vld [vmem:[%s34 + $0xa0] sm:$0xff]
    %v56 = vld [vmem:[%s34 + $0xa8] sm:$0xff]
    %v57 = vld [vmem:[%s34 + $0xb0] sm:$0xff]
    %v58 = vld [vmem:[%s34 + $0xb8] sm:$0xff]
    %v59 = vld [vmem:[%s34 + $0xc0] sm:$0xff]
    %v60 = vld [vmem:[%s34 + $0xc8] sm:$0xff]
    %v61 = vld [vmem:[%s34 + $0xd0] sm:$0xff]
    %v62 = vld [vmem:[%s34 + $0xd8] sm:$0xff]
    %v63 = vld [vmem:[%s34 + $0xe0] sm:$0xff]
    %v64 = vld [vmem:[%s34 + $0xe8] sm:$0xff]
    %v65 = vld [vmem:[%s34 + $0xf0] sm:$0xff]
    %v66 = vld [vmem:[%s34 + $0xf8] sm:$0xff]
    %68 = vset.pattern.permute.xlu0 0
    %69 = vperm.xlu0 %68, %v35
    %v70 = vpop.permute.xlu0 %69
    %73 = vset.pattern.permute.xlu0 0
    %74 = vperm.xlu0 %73, %v36
    %v75 = vpop.permute.xlu0 %74
    %78 = vset.pattern.permute.xlu0 0
    %79 = vperm.xlu0 %78, %v37
    %v80 = vpop.permute.xlu0 %79
    %83 = vset.pattern.permute.xlu0 0
    %84 = vperm.xlu0 %83, %v38
    %v85 = vpop.permute.xlu0 %84
    %88 = vset.pattern.permute.xlu0 0
    %89 = vperm.xlu0 %88, %v39
    %v90 = vpop.permute.xlu0 %89
    %93 = vset.pattern.permute.xlu0 0
    %94 = vperm.xlu0 %93, %v40
    %v95 = vpop.permute.xlu0 %94
    %98 = vset.pattern.permute.xlu0 0
    %99 = vperm.xlu0 %98, %v41
    %v100 = vpop.permute.xlu0 %99
    %103 = vset.pattern.permute.xlu0 0
    %104 = vperm.xlu0 %103, %v42
    %v105 = vpop.permute.xlu0 %104
    %108 = vset.pattern.permute.xlu0 0
    %109 = vperm.xlu0 %108, %v43
    %v110 = vpop.permute.xlu0 %109
    %113 = vset.pattern.permute.xlu0 0
    %114 = vperm.xlu0 %113, %v44
    %v115 = vpop.permute.xlu0 %114
    %118 = vset.pattern.permute.xlu0 0
    %119 = vperm.xlu0 %118, %v45
    %v120 = vpop.permute.xlu0 %119
    %123 = vset.pattern.permute.xlu0 0
    %124 = vperm.xlu0 %123, %v46
    %v125 = vpop.permute.xlu0 %124
    %128 = vset.pattern.permute.xlu0 0
    %129 = vperm.xlu0 %128, %v47
    %v130 = vpop.permute.xlu0 %129
    %133 = vset.pattern.permute.xlu0 0
    %134 = vperm.xlu0 %133, %v48
    %v135 = vpop.permute.xlu0 %134
    %138 = vset.pattern.permute.xlu0 0
    %139 = vperm.xlu0 %138, %v49
    %v140 = vpop.permute.xlu0 %139
    %143 = vset.pattern.permute.xlu0 0
    %144 = vperm.xlu0 %143, %v50
    %v145 = vpop.permute.xlu0 %144
    %148 = vset.pattern.permute.xlu0 0
    %149 = vperm.xlu0 %148, %v51
    %v150 = vpop.permute.xlu0 %149
    %153 = vset.pattern.permute.xlu0 0
    %154 = vperm.xlu0 %153, %v52
    %v155 = vpop.permute.xlu0 %154
    %158 = vset.pattern.permute.xlu0 0
    %159 = vperm.xlu0 %158, %v53
    %v160 = vpop.permute.xlu0 %159
    %163 = vset.pattern.permute.xlu0 0
    %164 = vperm.xlu0 %163, %v54
    %v165 = vpop.permute.xlu0 %164
    %168 = vset.pattern.permute.xlu0 0
    %169 = vperm.xlu0 %168, %v55
    %v170 = vpop.permute.xlu0 %169
    %173 = vset.pattern.permute.xlu0 0
    %174 = vperm.xlu0 %173, %v56
    %v175 = vpop.permute.xlu0 %174
    %178 = vset.pattern.permute.xlu0 0
    %179 = vperm.xlu0 %178, %v57
    %v180 = vpop.permute.xlu0 %179
    %183 = vset.pattern.permute.xlu0 0
    %184 = vperm.xlu0 %183, %v58
    %v185 = vpop.permute.xlu0 %184
    %188 = vset.pattern.permute.xlu0 0
    %189 = vperm.xlu0 %188, %v59
    %v190 = vpop.permute.xlu0 %189
    %193 = vset.pattern.permute.xlu0 0
    %194 = vperm.xlu0 %193, %v60
    %v195 = vpop.permute.xlu0 %194
    %198 = vset.pattern.permute.xlu0 0
    %199 = vperm.xlu0 %198, %v61
    %v200 = vpop.permute.xlu0 %199
    %203 = vset.pattern.permute.xlu0 0
    %204 = vperm.xlu0 %203, %v62
    %v205 = vpop.permute.xlu0 %204
    %208 = vset.pattern.permute.xlu0 0
    %209 = vperm.xlu0 %208, %v63
    %v210 = vpop.permute.xlu0 %209
    %213 = vset.pattern.permute.xlu0 0
    %214 = vperm.xlu0 %213, %v64
    %v215 = vpop.permute.xlu0 %214
    %218 = vset.pattern.permute.xlu0 0
    %219 = vperm.xlu0 %218, %v65
    %v220 = vpop.permute.xlu0 %219
    %223 = vset.pattern.permute.xlu0 0
    %224 = vperm.xlu0 %223, %v66
    %v225 = vpop.permute.xlu0 %224
    %v228 = vlaneseq
    %v229 = vshrl.u32 %v228, 7
    %v230 = vsub.s32 0, %v229
    %v231 = vrot.slane %v20, %v230
    %v233 = vmul.f32 %v70, %v231
    %v234 = vmul.f32 %v75, %v231
    %v235 = vmul.f32 %v80, %v231
    %v236 = vmul.f32 %v85, %v231
    %v237 = vmul.f32 %v90, %v231
    %v238 = vmul.f32 %v95, %v231
    %v239 = vmul.f32 %v100, %v231
    %v240 = vmul.f32 %v105, %v231
    %v241 = vmul.f32 %v110, %v231
    %v242 = vmul.f32 %v115, %v231
    %v243 = vmul.f32 %v120, %v231
    %v244 = vmul.f32 %v125, %v231
    %v245 = vmul.f32 %v130, %v231
    %v246 = vmul.f32 %v135, %v231
    %v247 = vmul.f32 %v140, %v231
    %v248 = vmul.f32 %v145, %v231
    %v249 = vmul.f32 %v150, %v231
    %v250 = vmul.f32 %v155, %v231
    %v251 = vmul.f32 %v160, %v231
    %v252 = vmul.f32 %v165, %v231
    %v253 = vmul.f32 %v170, %v231
    %v254 = vmul.f32 %v175, %v231
    %v255 = vmul.f32 %v180, %v231
    %v256 = vmul.f32 %v185, %v231
    %v257 = vmul.f32 %v190, %v231
    %v258 = vmul.f32 %v195, %v231
    %v259 = vmul.f32 %v200, %v231
    %v260 = vmul.f32 %v205, %v231
    %v261 = vmul.f32 %v210, %v231
    %v262 = vmul.f32 %v215, %v231
    %v263 = vmul.f32 %v220, %v231
    %v264 = vmul.f32 %v225, %v231
    %v266 = vlaneseq
    %v267 = vshrl.u32 %v266, 7
    %v268 = vsub.s32 0, %v267
    %v269 = vrot.slane %v21, %v268
    %v271 = vadd.f32 %v233, %v269
    %v272 = vadd.f32 %v234, %v269
    %v273 = vadd.f32 %v235, %v269
    %v274 = vadd.f32 %v236, %v269
    %v275 = vadd.f32 %v237, %v269
    %v276 = vadd.f32 %v238, %v269
    %v277 = vadd.f32 %v239, %v269
    %v278 = vadd.f32 %v240, %v269
    %v279 = vadd.f32 %v241, %v269
    %v280 = vadd.f32 %v242, %v269
    %v281 = vadd.f32 %v243, %v269
    %v282 = vadd.f32 %v244, %v269
    %v283 = vadd.f32 %v245, %v269
    %v284 = vadd.f32 %v246, %v269
    %v285 = vadd.f32 %v247, %v269
    %v286 = vadd.f32 %v248, %v269
    %v287 = vadd.f32 %v249, %v269
    %v288 = vadd.f32 %v250, %v269
    %v289 = vadd.f32 %v251, %v269
    %v290 = vadd.f32 %v252, %v269
    %v291 = vadd.f32 %v253, %v269
    %v292 = vadd.f32 %v254, %v269
    %v293 = vadd.f32 %v255, %v269
    %v294 = vadd.f32 %v256, %v269
    %v295 = vadd.f32 %v257, %v269
    %v296 = vadd.f32 %v258, %v269
    %v297 = vadd.f32 %v259, %v269
    %v298 = vadd.f32 %v260, %v269
    %v299 = vadd.f32 %v261, %v269
    %v300 = vadd.f32 %v262, %v269
    %v301 = vadd.f32 %v263, %v269
    %v302 = vadd.f32 %v264, %v269
    %v303 = vmax.f32 %v271, 0.0
    %v304 = vmax.f32 %v272, 0.0
    %v305 = vmax.f32 %v273, 0.0
    %v306 = vmax.f32 %v274, 0.0
    %v307 = vmax.f32 %v275, 0.0
    %v308 = vmax.f32 %v276, 0.0
    %v309 = vmax.f32 %v277, 0.0
    %v310 = vmax.f32 %v278, 0.0
    %v311 = vmax.f32 %v279, 0.0
    %v312 = vmax.f32 %v280, 0.0
    %v313 = vmax.f32 %v281, 0.0
    %v314 = vmax.f32 %v282, 0.0
    %v315 = vmax.f32 %v283, 0.0
    %v316 = vmax.f32 %v284, 0.0
    %v317 = vmax.f32 %v285, 0.0
    %v318 = vmax.f32 %v286, 0.0
    %v319 = vmax.f32 %v287, 0.0
    %v320 = vmax.f32 %v288, 0.0
    %v321 = vmax.f32 %v289, 0.0
    %v322 = vmax.f32 %v290, 0.0
    %v323 = vmax.f32 %v291, 0.0
    %v324 = vmax.f32 %v292, 0.0
    %v325 = vmax.f32 %v293, 0.0
    %v326 = vmax.f32 %v294, 0.0
    %v327 = vmax.f32 %v295, 0.0
    %v328 = vmax.f32 %v296, 0.0
    %v329 = vmax.f32 %v297, 0.0
    %v330 = vmax.f32 %v298, 0.0
    %v331 = vmax.f32 %v299, 0.0
    %v332 = vmax.f32 %v300, 0.0
    %v333 = vmax.f32 %v301, 0.0
    %v334 = vmax.f32 %v302, 0.0
    %v336 = vlaneseq
    %v337 = vshrl.u32 %v336, 7
    %v338 = vsub.s32 0, %v337
    %v339 = vrot.slane %v26, %v338
    %vm341 = vcmask 261120
    %v343 = vsel %vm341, %v303, 0
    %v346 = vsel %vm341, %v304, 0
    %v349 = vsel %vm341, %v305, 0
    %v352 = vsel %vm341, %v306, 0
    %v355 = vsel %vm341, %v307, 0
    %v358 = vsel %vm341, %v308, 0
    %v361 = vsel %vm341, %v309, 0
    %v364 = vsel %vm341, %v310, 0
    %v367 = vsel %vm341, %v311, 0
    %v370 = vsel %vm341, %v312, 0
    %v373 = vsel %vm341, %v313, 0
    %v376 = vsel %vm341, %v314, 0
    %v379 = vsel %vm341, %v315, 0
    %v382 = vsel %vm341, %v316, 0
    %v385 = vsel %vm341, %v317, 0
    %v388 = vsel %vm341, %v318, 0
    %v391 = vsel %vm341, %v319, 0
    %v394 = vsel %vm341, %v320, 0
    %v397 = vsel %vm341, %v321, 0
    %v400 = vsel %vm341, %v322, 0
    %v403 = vsel %vm341, %v323, 0
    %v406 = vsel %vm341, %v324, 0
    %v409 = vsel %vm341, %v325, 0
    %v412 = vsel %vm341, %v326, 0
    %v415 = vsel %vm341, %v327, 0
    %v418 = vsel %vm341, %v328, 0
    %v421 = vsel %vm341, %v329, 0
    %v424 = vsel %vm341, %v330, 0
    %v427 = vsel %vm341, %v331, 0
    %v430 = vsel %vm341, %v332, 0
    %v433 = vsel %vm341, %v333, 0
    %v436 = vsel %vm341, %v334, 0
    %438 = vmatprep.subr.mxu0 0.0
    %439 = vmatpush1.msra.mxu0 0.0
    %440 = vmatprep.subr.mxu0 0.0
    %441 = vmatpush1.msra.mxu0 0.0
    %442 = vmatprep.subr.mxu0 0.0
    %443 = vmatpush1.msra.mxu0 0.0
    %444 = vmatprep.subr.mxu0 0.0
    %445 = vmatpush1.msra.mxu0 0.0
    %446 = vmatprep.subr.mxu0 0.0
    %447 = vmatpush1.msra.mxu0 0.0
    %448 = vmatprep.subr.mxu0 0.0
    %449 = vmatpush1.msra.mxu0 0.0
    %450 = vmatprep.subr.mxu0 0.0
    %451 = vmatpush1.msra.mxu0 0.0
    %452 = vmatprep.subr.mxu0 0.0
    %453 = vmatpush1.msra.mxu0 0.0
    %454 = vmatprep.subr.mxu0 0.0
    %455 = vmatpush1.msra.mxu0 0.0
    %456 = vmatprep.subr.mxu0 0.0
    %457 = vmatpush1.msra.mxu0 0.0
    %458 = vmatprep.subr.mxu0 0.0
    %459 = vmatpush1.msra.mxu0 0.0
    %460 = vmatprep.subr.mxu0 0.0
    %461 = vmatpush1.msra.mxu0 0.0
    %462 = vmatprep.subr.mxu0 0.0
    %463 = vmatpush1.msra.mxu0 %v25
    %464 = vmatprep.subr.mxu0 0.0
    %465 = vmatpush1.msra.mxu0 %v24
    %466 = vmatprep.subr.mxu0 0.0
    %467 = vmatpush1.msra.mxu0 %v23
    %468 = vmatprep.subr.mxu0 0.0
    %469 = vmatpush1.msra.mxu0 %v22
    %470 = vmatprep.subr.mxu0 0.0
    %471 = vmatpush2.msra.mxu0 0.0
    %472 = vmatprep.subr.mxu0 0.0
    %473 = vmatpush2.msra.mxu0 0.0
    %474 = vmatprep.subr.mxu0 0.0
    %475 = vmatpush2.msra.mxu0 0.0
    %476 = vmatprep.subr.mxu0 0.0
    %477 = vmatpush2.msra.mxu0 0.0
    %478 = vmatprep.subr.mxu0 0.0
    %479 = vmatpush2.msra.mxu0 0.0
    %480 = vmatprep.subr.mxu0 0.0
    %481 = vmatpush2.msra.mxu0 0.0
    %482 = vmatprep.subr.mxu0 0.0
    %483 = vmatpush2.msra.mxu0 0.0
    %484 = vmatprep.subr.mxu0 0.0
    %485 = vmatpush2.msra.mxu0 0.0
    %486 = vmatprep.subr.mxu0 0.0
    %487 = vmatpush2.msra.mxu0 0.0
    %488 = vmatprep.subr.mxu0 0.0
    %489 = vmatpush2.msra.mxu0 0.0
    %490 = vmatprep.subr.mxu0 0.0
    %491 = vmatpush2.msra.mxu0 0.0
    %492 = vmatprep.subr.mxu0 0.0
    %493 = vmatpush2.msra.mxu0 0.0
    %494 = vmatprep.subr.mxu0 0.0
    %495 = vmatpush2.msra.mxu0 0.0
    %496 = vmatprep.subr.mxu0 0.0
    %497 = vmatpush2.msra.mxu0 0.0
    %498 = vmatprep.subr.mxu0 0.0
    %499 = vmatpush2.msra.mxu0 0.0
    %500 = vmatprep.subr.mxu0 0.0
    %501 = vmatpush2.msra.mxu0 0.0
    %502 = vmatprep.mubr.f32.mxu0 0.0
    %503 = vmatmul.mubr.f32.gmra.mxu0 %v343
    %v504 = vpop.f32.mrf.mxu0
    %v505 = vadd.f32 %v339, %v504
    %v506 = vpop.f32.mrf.mxu0
    %507 = vmatprep.mubr.f32.mxu0 0.0
    %508 = vmatmul.mubr.f32.gmra.mxu0 %v346
    %v509 = vpop.f32.mrf.mxu0
    %v510 = vadd.f32 %v339, %v509
    %v511 = vpop.f32.mrf.mxu0
    %512 = vmatprep.mubr.f32.mxu0 0.0
    %513 = vmatmul.mubr.f32.gmra.mxu0 %v349
    %v514 = vpop.f32.mrf.mxu0
    %v515 = vadd.f32 %v339, %v514
    %v516 = vpop.f32.mrf.mxu0
    %517 = vmatprep.mubr.f32.mxu0 0.0
    %518 = vmatmul.mubr.f32.gmra.mxu0 %v352
    %v519 = vpop.f32.mrf.mxu0
    %v520 = vadd.f32 %v339, %v519
    %v521 = vpop.f32.mrf.mxu0
    %522 = vmatprep.mubr.f32.mxu0 0.0
    %523 = vmatmul.mubr.f32.gmra.mxu0 %v355
    %v524 = vpop.f32.mrf.mxu0
    %v525 = vadd.f32 %v339, %v524
    %v526 = vpop.f32.mrf.mxu0
    %527 = vmatprep.mubr.f32.mxu0 0.0
    %528 = vmatmul.mubr.f32.gmra.mxu0 %v358
    %v529 = vpop.f32.mrf.mxu0
    %v530 = vadd.f32 %v339, %v529
    %v531 = vpop.f32.mrf.mxu0
    %532 = vmatprep.mubr.f32.mxu0 0.0
    %533 = vmatmul.mubr.f32.gmra.mxu0 %v361
    %v534 = vpop.f32.mrf.mxu0
    %v535 = vadd.f32 %v339, %v534
    %v536 = vpop.f32.mrf.mxu0
    %537 = vmatprep.mubr.f32.mxu0 0.0
    %538 = vmatmul.mubr.f32.gmra.mxu0 %v364
    %v539 = vpop.f32.mrf.mxu0
    %v540 = vadd.f32 %v339, %v539
    %v541 = vpop.f32.mrf.mxu0
    %542 = vmatprep.mubr.f32.mxu0 0.0
    %543 = vmatmul.mubr.f32.gmra.mxu0 %v367
    %v544 = vpop.f32.mrf.mxu0
    %v545 = vadd.f32 %v339, %v544
    %v546 = vpop.f32.mrf.mxu0
    %547 = vmatprep.mubr.f32.mxu0 0.0
    %548 = vmatmul.mubr.f32.gmra.mxu0 %v370
    %v549 = vpop.f32.mrf.mxu0
    %v550 = vadd.f32 %v339, %v549
    %v551 = vpop.f32.mrf.mxu0
    %552 = vmatprep.mubr.f32.mxu0 0.0
    %553 = vmatmul.mubr.f32.gmra.mxu0 %v373
    %v554 = vpop.f32.mrf.mxu0
    %v555 = vadd.f32 %v339, %v554
    %v556 = vpop.f32.mrf.mxu0
    %557 = vmatprep.mubr.f32.mxu0 0.0
    %558 = vmatmul.mubr.f32.gmra.mxu0 %v376
    %v559 = vpop.f32.mrf.mxu0
    %v560 = vadd.f32 %v339, %v559
    %v561 = vpop.f32.mrf.mxu0
    %562 = vmatprep.mubr.f32.mxu0 0.0
    %563 = vmatmul.mubr.f32.gmra.mxu0 %v379
    %v564 = vpop.f32.mrf.mxu0
    %v565 = vadd.f32 %v339, %v564
    %v566 = vpop.f32.mrf.mxu0
    %567 = vmatprep.mubr.f32.mxu0 0.0
    %568 = vmatmul.mubr.f32.gmra.mxu0 %v382
    %v569 = vpop.f32.mrf.mxu0
    %v570 = vadd.f32 %v339, %v569
    %v571 = vpop.f32.mrf.mxu0
    %572 = vmatprep.mubr.f32.mxu0 0.0
    %573 = vmatmul.mubr.f32.gmra.mxu0 %v385
    %v574 = vpop.f32.mrf.mxu0
    %v575 = vadd.f32 %v339, %v574
    %v576 = vpop.f32.mrf.mxu0
    %577 = vmatprep.mubr.f32.mxu0 0.0
    %578 = vmatmul.mubr.f32.gmra.mxu0 %v388
    %v579 = vpop.f32.mrf.mxu0
    %v580 = vadd.f32 %v339, %v579
    %v581 = vpop.f32.mrf.mxu0
    %582 = vmatprep.mubr.f32.mxu0 0.0
    %583 = vmatmul.mubr.f32.gmra.mxu0 %v391
    %v584 = vpop.f32.mrf.mxu0
    %v585 = vadd.f32 %v339, %v584
    %v586 = vpop.f32.mrf.mxu0
    %587 = vmatprep.mubr.f32.mxu0 0.0
    %588 = vmatmul.mubr.f32.gmra.mxu0 %v394
    %v589 = vpop.f32.mrf.mxu0
    %v590 = vadd.f32 %v339, %v589
    %v591 = vpop.f32.mrf.mxu0
    %592 = vmatprep.mubr.f32.mxu0 0.0
    %593 = vmatmul.mubr.f32.gmra.mxu0 %v397
    %v594 = vpop.f32.mrf.mxu0
    %v595 = vadd.f32 %v339, %v594
    %v596 = vpop.f32.mrf.mxu0
    %597 = vmatprep.mubr.f32.mxu0 0.0
    %598 = vmatmul.mubr.f32.gmra.mxu0 %v400
    %v599 = vpop.f32.mrf.mxu0
    %v600 = vadd.f32 %v339, %v599
    %v601 = vpop.f32.mrf.mxu0
    %602 = vmatprep.mubr.f32.mxu0 0.0
    %603 = vmatmul.mubr.f32.gmra.mxu0 %v403
    %v604 = vpop.f32.mrf.mxu0
    %v605 = vadd.f32 %v339, %v604
    %v606 = vpop.f32.mrf.mxu0
    %607 = vmatprep.mubr.f32.mxu0 0.0
    %608 = vmatmul.mubr.f32.gmra.mxu0 %v406
    %v609 = vpop.f32.mrf.mxu0
    %v610 = vadd.f32 %v339, %v609
    %v611 = vpop.f32.mrf.mxu0
    %612 = vmatprep.mubr.f32.mxu0 0.0
    %613 = vmatmul.mubr.f32.gmra.mxu0 %v409
    %v614 = vpop.f32.mrf.mxu0
    %v615 = vadd.f32 %v339, %v614
    %v616 = vpop.f32.mrf.mxu0
    %617 = vmatprep.mubr.f32.mxu0 0.0
    %618 = vmatmul.mubr.f32.gmra.mxu0 %v412
    %v619 = vpop.f32.mrf.mxu0
    %v620 = vadd.f32 %v339, %v619
    %v621 = vpop.f32.mrf.mxu0
    %622 = vmatprep.mubr.f32.mxu0 0.0
    %623 = vmatmul.mubr.f32.gmra.mxu0 %v415
    %v624 = vpop.f32.mrf.mxu0
    %v625 = vadd.f32 %v339, %v624
    %v626 = vpop.f32.mrf.mxu0
    %627 = vmatprep.mubr.f32.mxu0 0.0
    %628 = vmatmul.mubr.f32.gmra.mxu0 %v418
    %v629 = vpop.f32.mrf.mxu0
    %v630 = vadd.f32 %v339, %v629
    %v631 = vpop.f32.mrf.mxu0
    %632 = vmatprep.mubr.f32.mxu0 0.0
    %633 = vmatmul.mubr.f32.gmra.mxu0 %v421
    %v634 = vpop.f32.mrf.mxu0
    %v635 = vadd.f32 %v339, %v634
    %v636 = vpop.f32.mrf.mxu0
    %637 = vmatprep.mubr.f32.mxu0 0.0
    %638 = vmatmul.mubr.f32.gmra.mxu0 %v424
    %v639 = vpop.f32.mrf.mxu0
    %v640 = vadd.f32 %v339, %v639
    %v641 = vpop.f32.mrf.mxu0
    %642 = vmatprep.mubr.f32.mxu0 0.0
    %643 = vmatmul.mubr.f32.gmra.mxu0 %v427
    %v644 = vpop.f32.mrf.mxu0
    %v645 = vadd.f32 %v339, %v644
    %v646 = vpop.f32.mrf.mxu0
    %647 = vmatprep.mubr.f32.mxu0 0.0
    %648 = vmatmul.mubr.f32.gmra.mxu0 %v430
    %v649 = vpop.f32.mrf.mxu0
    %v650 = vadd.f32 %v339, %v649
    %v651 = vpop.f32.mrf.mxu0
    %652 = vmatprep.mubr.f32.mxu0 0.0
    %653 = vmatmul.mubr.f32.gmra.mxu0 %v433
    %v654 = vpop.f32.mrf.mxu0
    %v655 = vadd.f32 %v339, %v654
    %v656 = vpop.f32.mrf.mxu0
    %657 = vmatprep.mubr.f32.mxu0 0.0
    %658 = vmatmul.mubr.f32.gmra.mxu0 %v436
    %v659 = vpop.f32.mrf.mxu0
    %v660 = vadd.f32 %v339, %v659
    %v661 = vpop.f32.mrf.mxu0
    %662 = vdwg.mxu0
    %vm663 = vcmp.gt.f32.partialorder %v505, 20.0
    %vm664 = vcmp.gt.f32.partialorder %v510, 20.0
    %vm665 = vcmp.gt.f32.partialorder %v515, 20.0
    %vm666 = vcmp.gt.f32.partialorder %v520, 20.0
    %vm667 = vcmp.gt.f32.partialorder %v525, 20.0
    %vm668 = vcmp.gt.f32.partialorder %v530, 20.0
    %vm669 = vcmp.gt.f32.partialorder %v535, 20.0
    %vm670 = vcmp.gt.f32.partialorder %v540, 20.0
    %vm671 = vcmp.gt.f32.partialorder %v545, 20.0
    %vm672 = vcmp.gt.f32.partialorder %v550, 20.0
    %vm673 = vcmp.gt.f32.partialorder %v555, 20.0
    %vm674 = vcmp.gt.f32.partialorder %v560, 20.0
    %vm675 = vcmp.gt.f32.partialorder %v565, 20.0
    %vm676 = vcmp.gt.f32.partialorder %v570, 20.0
    %vm677 = vcmp.gt.f32.partialorder %v575, 20.0
    %vm678 = vcmp.gt.f32.partialorder %v580, 20.0
    %vm679 = vcmp.gt.f32.partialorder %v585, 20.0
    %vm680 = vcmp.gt.f32.partialorder %v590, 20.0
    %vm681 = vcmp.gt.f32.partialorder %v595, 20.0
    %vm682 = vcmp.gt.f32.partialorder %v600, 20.0
    %vm683 = vcmp.gt.f32.partialorder %v605, 20.0
    %vm684 = vcmp.gt.f32.partialorder %v610, 20.0
    %vm685 = vcmp.gt.f32.partialorder %v615, 20.0
    %vm686 = vcmp.gt.f32.partialorder %v620, 20.0
    %vm687 = vcmp.gt.f32.partialorder %v625, 20.0
    %vm688 = vcmp.gt.f32.partialorder %v630, 20.0
    %vm689 = vcmp.gt.f32.partialorder %v635, 20.0
    %vm690 = vcmp.gt.f32.partialorder %v640, 20.0
    %vm691 = vcmp.gt.f32.partialorder %v645, 20.0
    %vm692 = vcmp.gt.f32.partialorder %v650, 20.0
    %vm693 = vcmp.gt.f32.partialorder %v655, 20.0
    %vm694 = vcmp.gt.f32.partialorder %v660, 20.0
    %v695 = vmin.f32 %v505, 20.0
    %v696 = vmin.f32 %v510, 20.0
    %v697 = vmin.f32 %v515, 20.0
    %v698 = vmin.f32 %v520, 20.0
    %v699 = vmin.f32 %v525, 20.0
    %v700 = vmin.f32 %v530, 20.0
    %v701 = vmin.f32 %v535, 20.0
    %v702 = vmin.f32 %v540, 20.0
    %v703 = vmin.f32 %v545, 20.0
    %v704 = vmin.f32 %v550, 20.0
    %v705 = vmin.f32 %v555, 20.0
    %v706 = vmin.f32 %v560, 20.0
    %v707 = vmin.f32 %v565, 20.0
    %v708 = vmin.f32 %v570, 20.0
    %v709 = vmin.f32 %v575, 20.0
    %v710 = vmin.f32 %v580, 20.0
    %v711 = vmin.f32 %v585, 20.0
    %v712 = vmin.f32 %v590, 20.0
    %v713 = vmin.f32 %v595, 20.0
    %v714 = vmin.f32 %v600, 20.0
    %v715 = vmin.f32 %v605, 20.0
    %v716 = vmin.f32 %v610, 20.0
    %v717 = vmin.f32 %v615, 20.0
    %v718 = vmin.f32 %v620, 20.0
    %v719 = vmin.f32 %v625, 20.0
    %v720 = vmin.f32 %v630, 20.0
    %v721 = vmin.f32 %v635, 20.0
    %v722 = vmin.f32 %v640, 20.0
    %v723 = vmin.f32 %v645, 20.0
    %v724 = vmin.f32 %v650, 20.0
    %v725 = vmin.f32 %v655, 20.0
    %v726 = vmin.f32 %v660, 20.0
    %v727 = vmul.f32 %v695, 1.442695
    %v728 = vpow.pop %v727
    %v729 = vmul.f32 %v696, 1.442695
    %v730 = vpow.pop %v729
    %v731 = vmul.f32 %v697, 1.442695
    %v732 = vpow.pop %v731
    %v733 = vmul.f32 %v698, 1.442695
    %v734 = vpow.pop %v733
    %v735 = vmul.f32 %v699, 1.442695
    %v736 = vpow.pop %v735
    %v737 = vmul.f32 %v700, 1.442695
    %v738 = vpow.pop %v737
    %v739 = vmul.f32 %v701, 1.442695
    %v740 = vpow.pop %v739
    %v741 = vmul.f32 %v702, 1.442695
    %v742 = vpow.pop %v741
    %v743 = vmul.f32 %v703, 1.442695
    %v744 = vpow.pop %v743
    %v745 = vmul.f32 %v704, 1.442695
    %v746 = vpow.pop %v745
    %v747 = vmul.f32 %v705, 1.442695
    %v748 = vpow.pop %v747
    %v749 = vmul.f32 %v706, 1.442695
    %v750 = vpow.pop %v749
    %v751 = vmul.f32 %v707, 1.442695
    %v752 = vpow.pop %v751
    %v753 = vmul.f32 %v708, 1.442695
    %v754 = vpow.pop %v753
    %v755 = vmul.f32 %v709, 1.442695
    %v756 = vpow.pop %v755
    %v757 = vmul.f32 %v710, 1.442695
    %v758 = vpow.pop %v757
    %v759 = vmul.f32 %v711, 1.442695
    %v760 = vpow.pop %v759
    %v761 = vmul.f32 %v712, 1.442695
    %v762 = vpow.pop %v761
    %v763 = vmul.f32 %v713, 1.442695
    %v764 = vpow.pop %v763
    %v765 = vmul.f32 %v714, 1.442695
    %v766 = vpow.pop %v765
    %v767 = vmul.f32 %v715, 1.442695
    %v768 = vpow.pop %v767
    %v769 = vmul.f32 %v716, 1.442695
    %v770 = vpow.pop %v769
    %v771 = vmul.f32 %v717, 1.442695
    %v772 = vpow.pop %v771
    %v773 = vmul.f32 %v718, 1.442695
    %v774 = vpow.pop %v773
    %v775 = vmul.f32 %v719, 1.442695
    %v776 = vpow.pop %v775
    %v777 = vmul.f32 %v720, 1.442695
    %v778 = vpow.pop %v777
    %v779 = vmul.f32 %v721, 1.442695
    %v780 = vpow.pop %v779
    %v781 = vmul.f32 %v722, 1.442695
    %v782 = vpow.pop %v781
    %v783 = vmul.f32 %v723, 1.442695
    %v784 = vpow.pop %v783
    %v785 = vmul.f32 %v724, 1.442695
    %v786 = vpow.pop %v785
    %v787 = vmul.f32 %v725, 1.442695
    %v788 = vpow.pop %v787
    %v789 = vmul.f32 %v726, 1.442695
    %v790 = vpow.pop %v789
    %v791 = vadd.f32 %v728, 1.0
    %v792 = vlog2.pop %v791
    %v793 = vmul.f32 %v792, 0.6931472
    %v794 = vmul.f32 -0.5, %v728
    %v795 = vadd.f32 %v794, 1.0
    %v796 = vmul.f32 %v795, %v728
    %v797 = vand.u32 2147483647, %v728
    %vm798 = vcmp.lt.f32.partialorder %v797, 0.0004427343
    %v799 = vsel %vm798, %v796, %v793
    %v800 = vadd.f32 %v730, 1.0
    %v801 = vlog2.pop %v800
    %v802 = vmul.f32 %v801, 0.6931472
    %v803 = vmul.f32 -0.5, %v730
    %v804 = vadd.f32 %v803, 1.0
    %v805 = vmul.f32 %v804, %v730
    %v806 = vand.u32 2147483647, %v730
    %vm807 = vcmp.lt.f32.partialorder %v806, 0.0004427343
    %v808 = vsel %vm807, %v805, %v802
    %v809 = vadd.f32 %v732, 1.0
    %v810 = vlog2.pop %v809
    %v811 = vmul.f32 %v810, 0.6931472
    %v812 = vmul.f32 -0.5, %v732
    %v813 = vadd.f32 %v812, 1.0
    %v814 = vmul.f32 %v813, %v732
    %v815 = vand.u32 2147483647, %v732
    %vm816 = vcmp.lt.f32.partialorder %v815, 0.0004427343
    %v817 = vsel %vm816, %v814, %v811
    %v818 = vadd.f32 %v734, 1.0
    %v819 = vlog2.pop %v818
    %v820 = vmul.f32 %v819, 0.6931472
    %v821 = vmul.f32 -0.5, %v734
    %v822 = vadd.f32 %v821, 1.0
    %v823 = vmul.f32 %v822, %v734
    %v824 = vand.u32 2147483647, %v734
    %vm825 = vcmp.lt.f32.partialorder %v824, 0.0004427343
    %v826 = vsel %vm825, %v823, %v820
    %v827 = vadd.f32 %v736, 1.0
    %v828 = vlog2.pop %v827
    %v829 = vmul.f32 %v828, 0.6931472
    %v830 = vmul.f32 -0.5, %v736
    %v831 = vadd.f32 %v830, 1.0
    %v832 = vmul.f32 %v831, %v736
    %v833 = vand.u32 2147483647, %v736
    %vm834 = vcmp.lt.f32.partialorder %v833, 0.0004427343
    %v835 = vsel %vm834, %v832, %v829
    %v836 = vadd.f32 %v738, 1.0
    %v837 = vlog2.pop %v836
    %v838 = vmul.f32 %v837, 0.6931472
    %v839 = vmul.f32 -0.5, %v738
    %v840 = vadd.f32 %v839, 1.0
    %v841 = vmul.f32 %v840, %v738
    %v842 = vand.u32 2147483647, %v738
    %vm843 = vcmp.lt.f32.partialorder %v842, 0.0004427343
    %v844 = vsel %vm843, %v841, %v838
    %v845 = vadd.f32 %v740, 1.0
    %v846 = vlog2.pop %v845
    %v847 = vmul.f32 %v846, 0.6931472
    %v848 = vmul.f32 -0.5, %v740
    %v849 = vadd.f32 %v848, 1.0
    %v850 = vmul.f32 %v849, %v740
    %v851 = vand.u32 2147483647, %v740
    %vm852 = vcmp.lt.f32.partialorder %v851, 0.0004427343
    %v853 = vsel %vm852, %v850, %v847
    %v854 = vadd.f32 %v742, 1.0
    %v855 = vlog2.pop %v854
    %v856 = vmul.f32 %v855, 0.6931472
    %v857 = vmul.f32 -0.5, %v742
    %v858 = vadd.f32 %v857, 1.0
    %v859 = vmul.f32 %v858, %v742
    %v860 = vand.u32 2147483647, %v742
    %vm861 = vcmp.lt.f32.partialorder %v860, 0.0004427343
    %v862 = vsel %vm861, %v859, %v856
    %v863 = vadd.f32 %v744, 1.0
    %v864 = vlog2.pop %v863
    %v865 = vmul.f32 %v864, 0.6931472
    %v866 = vmul.f32 -0.5, %v744
    %v867 = vadd.f32 %v866, 1.0
    %v868 = vmul.f32 %v867, %v744
    %v869 = vand.u32 2147483647, %v744
    %vm870 = vcmp.lt.f32.partialorder %v869, 0.0004427343
    %v871 = vsel %vm870, %v868, %v865
    %v872 = vadd.f32 %v746, 1.0
    %v873 = vlog2.pop %v872
    %v874 = vmul.f32 %v873, 0.6931472
    %v875 = vmul.f32 -0.5, %v746
    %v876 = vadd.f32 %v875, 1.0
    %v877 = vmul.f32 %v876, %v746
    %v878 = vand.u32 2147483647, %v746
    %vm879 = vcmp.lt.f32.partialorder %v878, 0.0004427343
    %v880 = vsel %vm879, %v877, %v874
    %v881 = vadd.f32 %v748, 1.0
    %v882 = vlog2.pop %v881
    %v883 = vmul.f32 %v882, 0.6931472
    %v884 = vmul.f32 -0.5, %v748
    %v885 = vadd.f32 %v884, 1.0
    %v886 = vmul.f32 %v885, %v748
    %v887 = vand.u32 2147483647, %v748
    %vm888 = vcmp.lt.f32.partialorder %v887, 0.0004427343
    %v889 = vsel %vm888, %v886, %v883
    %v890 = vadd.f32 %v750, 1.0
    %v891 = vlog2.pop %v890
    %v892 = vmul.f32 %v891, 0.6931472
    %v893 = vmul.f32 -0.5, %v750
    %v894 = vadd.f32 %v893, 1.0
    %v895 = vmul.f32 %v894, %v750
    %v896 = vand.u32 2147483647, %v750
    %vm897 = vcmp.lt.f32.partialorder %v896, 0.0004427343
    %v898 = vsel %vm897, %v895, %v892
    %v899 = vadd.f32 %v752, 1.0
    %v900 = vlog2.pop %v899
    %v901 = vmul.f32 %v900, 0.6931472
    %v902 = vmul.f32 -0.5, %v752
    %v903 = vadd.f32 %v902, 1.0
    %v904 = vmul.f32 %v903, %v752
    %v905 = vand.u32 2147483647, %v752
    %vm906 = vcmp.lt.f32.partialorder %v905, 0.0004427343
    %v907 = vsel %vm906, %v904, %v901
    %v908 = vadd.f32 %v754, 1.0
    %v909 = vlog2.pop %v908
    %v910 = vmul.f32 %v909, 0.6931472
    %v911 = vmul.f32 -0.5, %v754
    %v912 = vadd.f32 %v911, 1.0
    %v913 = vmul.f32 %v912, %v754
    %v914 = vand.u32 2147483647, %v754
    %vm915 = vcmp.lt.f32.partialorder %v914, 0.0004427343
    %v916 = vsel %vm915, %v913, %v910
    %v917 = vadd.f32 %v756, 1.0
    %v918 = vlog2.pop %v917
    %v919 = vmul.f32 %v918, 0.6931472
    %v920 = vmul.f32 -0.5, %v756
    %v921 = vadd.f32 %v920, 1.0
    %v922 = vmul.f32 %v921, %v756
    %v923 = vand.u32 2147483647, %v756
    %vm924 = vcmp.lt.f32.partialorder %v923, 0.0004427343
    %v925 = vsel %vm924, %v922, %v919
    %v926 = vadd.f32 %v758, 1.0
    %v927 = vlog2.pop %v926
    %v928 = vmul.f32 %v927, 0.6931472
    %v929 = vmul.f32 -0.5, %v758
    %v930 = vadd.f32 %v929, 1.0
    %v931 = vmul.f32 %v930, %v758
    %v932 = vand.u32 2147483647, %v758
    %vm933 = vcmp.lt.f32.partialorder %v932, 0.0004427343
    %v934 = vsel %vm933, %v931, %v928
    %v935 = vadd.f32 %v760, 1.0
    %v936 = vlog2.pop %v935
    %v937 = vmul.f32 %v936, 0.6931472
    %v938 = vmul.f32 -0.5, %v760
    %v939 = vadd.f32 %v938, 1.0
    %v940 = vmul.f32 %v939, %v760
    %v941 = vand.u32 2147483647, %v760
    %vm942 = vcmp.lt.f32.partialorder %v941, 0.0004427343
    %v943 = vsel %vm942, %v940, %v937
    %v944 = vadd.f32 %v762, 1.0
    %v945 = vlog2.pop %v944
    %v946 = vmul.f32 %v945, 0.6931472
    %v947 = vmul.f32 -0.5, %v762
    %v948 = vadd.f32 %v947, 1.0
    %v949 = vmul.f32 %v948, %v762
    %v950 = vand.u32 2147483647, %v762
    %vm951 = vcmp.lt.f32.partialorder %v950, 0.0004427343
    %v952 = vsel %vm951, %v949, %v946
    %v953 = vadd.f32 %v764, 1.0
    %v954 = vlog2.pop %v953
    %v955 = vmul.f32 %v954, 0.6931472
    %v956 = vmul.f32 -0.5, %v764
    %v957 = vadd.f32 %v956, 1.0
    %v958 = vmul.f32 %v957, %v764
    %v959 = vand.u32 2147483647, %v764
    %vm960 = vcmp.lt.f32.partialorder %v959, 0.0004427343
    %v961 = vsel %vm960, %v958, %v955
    %v962 = vadd.f32 %v766, 1.0
    %v963 = vlog2.pop %v962
    %v964 = vmul.f32 %v963, 0.6931472
    %v965 = vmul.f32 -0.5, %v766
    %v966 = vadd.f32 %v965, 1.0
    %v967 = vmul.f32 %v966, %v766
    %v968 = vand.u32 2147483647, %v766
    %vm969 = vcmp.lt.f32.partialorder %v968, 0.0004427343
    %v970 = vsel %vm969, %v967, %v964
    %v971 = vadd.f32 %v768, 1.0
    %v972 = vlog2.pop %v971
    %v973 = vmul.f32 %v972, 0.6931472
    %v974 = vmul.f32 -0.5, %v768
    %v975 = vadd.f32 %v974, 1.0
    %v976 = vmul.f32 %v975, %v768
    %v977 = vand.u32 2147483647, %v768
    %vm978 = vcmp.lt.f32.partialorder %v977, 0.0004427343
    %v979 = vsel %vm978, %v976, %v973
    %v980 = vadd.f32 %v770, 1.0
    %v981 = vlog2.pop %v980
    %v982 = vmul.f32 %v981, 0.6931472
    %v983 = vmul.f32 -0.5, %v770
    %v984 = vadd.f32 %v983, 1.0
    %v985 = vmul.f32 %v984, %v770
    %v986 = vand.u32 2147483647, %v770
    %vm987 = vcmp.lt.f32.partialorder %v986, 0.0004427343
    %v988 = vsel %vm987, %v985, %v982
    %v989 = vadd.f32 %v772, 1.0
    %v990 = vlog2.pop %v989
    %v991 = vmul.f32 %v990, 0.6931472
    %v992 = vmul.f32 -0.5, %v772
    %v993 = vadd.f32 %v992, 1.0
    %v994 = vmul.f32 %v993, %v772
    %v995 = vand.u32 2147483647, %v772
    %vm996 = vcmp.lt.f32.partialorder %v995, 0.0004427343
    %v997 = vsel %vm996, %v994, %v991
    %v998 = vadd.f32 %v774, 1.0
    %v999 = vlog2.pop %v998
    %v1000 = vmul.f32 %v999, 0.6931472
    %v1001 = vmul.f32 -0.5, %v774
    %v1002 = vadd.f32 %v1001, 1.0
    %v1003 = vmul.f32 %v1002, %v774
    %v1004 = vand.u32 2147483647, %v774
    %vm1005 = vcmp.lt.f32.partialorder %v1004, 0.0004427343
    %v1006 = vsel %vm1005, %v1003, %v1000
    %v1007 = vadd.f32 %v776, 1.0
    %v1008 = vlog2.pop %v1007
    %v1009 = vmul.f32 %v1008, 0.6931472
    %v1010 = vmul.f32 -0.5, %v776
    %v1011 = vadd.f32 %v1010, 1.0
    %v1012 = vmul.f32 %v1011, %v776
    %v1013 = vand.u32 2147483647, %v776
    %vm1014 = vcmp.lt.f32.partialorder %v1013, 0.0004427343
    %v1015 = vsel %vm1014, %v1012, %v1009
    %v1016 = vadd.f32 %v778, 1.0
    %v1017 = vlog2.pop %v1016
    %v1018 = vmul.f32 %v1017, 0.6931472
    %v1019 = vmul.f32 -0.5, %v778
    %v1020 = vadd.f32 %v1019, 1.0
    %v1021 = vmul.f32 %v1020, %v778
    %v1022 = vand.u32 2147483647, %v778
    %vm1023 = vcmp.lt.f32.partialorder %v1022, 0.0004427343
    %v1024 = vsel %vm1023, %v1021, %v1018
    %v1025 = vadd.f32 %v780, 1.0
    %v1026 = vlog2.pop %v1025
    %v1027 = vmul.f32 %v1026, 0.6931472
    %v1028 = vmul.f32 -0.5, %v780
    %v1029 = vadd.f32 %v1028, 1.0
    %v1030 = vmul.f32 %v1029, %v780
    %v1031 = vand.u32 2147483647, %v780
    %vm1032 = vcmp.lt.f32.partialorder %v1031, 0.0004427343
    %v1033 = vsel %vm1032, %v1030, %v1027
    %v1034 = vadd.f32 %v782, 1.0
    %v1035 = vlog2.pop %v1034
    %v1036 = vmul.f32 %v1035, 0.6931472
    %v1037 = vmul.f32 -0.5, %v782
    %v1038 = vadd.f32 %v1037, 1.0
    %v1039 = vmul.f32 %v1038, %v782
    %v1040 = vand.u32 2147483647, %v782
    %vm1041 = vcmp.lt.f32.partialorder %v1040, 0.0004427343
    %v1042 = vsel %vm1041, %v1039, %v1036
    %v1043 = vadd.f32 %v784, 1.0
    %v1044 = vlog2.pop %v1043
    %v1045 = vmul.f32 %v1044, 0.6931472
    %v1046 = vmul.f32 -0.5, %v784
    %v1047 = vadd.f32 %v1046, 1.0
    %v1048 = vmul.f32 %v1047, %v784
    %v1049 = vand.u32 2147483647, %v784
    %vm1050 = vcmp.lt.f32.partialorder %v1049, 0.0004427343
    %v1051 = vsel %vm1050, %v1048, %v1045
    %v1052 = vadd.f32 %v786, 1.0
    %v1053 = vlog2.pop %v1052
    %v1054 = vmul.f32 %v1053, 0.6931472
    %v1055 = vmul.f32 -0.5, %v786
    %v1056 = vadd.f32 %v1055, 1.0
    %v1057 = vmul.f32 %v1056, %v786
    %v1058 = vand.u32 2147483647, %v786
    %vm1059 = vcmp.lt.f32.partialorder %v1058, 0.0004427343
    %v1060 = vsel %vm1059, %v1057, %v1054
    %v1061 = vadd.f32 %v788, 1.0
    %v1062 = vlog2.pop %v1061
    %v1063 = vmul.f32 %v1062, 0.6931472
    %v1064 = vmul.f32 -0.5, %v788
    %v1065 = vadd.f32 %v1064, 1.0
    %v1066 = vmul.f32 %v1065, %v788
    %v1067 = vand.u32 2147483647, %v788
    %vm1068 = vcmp.lt.f32.partialorder %v1067, 0.0004427343
    %v1069 = vsel %vm1068, %v1066, %v1063
    %v1070 = vadd.f32 %v790, 1.0
    %v1071 = vlog2.pop %v1070
    %v1072 = vmul.f32 %v1071, 0.6931472
    %v1073 = vmul.f32 -0.5, %v790
    %v1074 = vadd.f32 %v1073, 1.0
    %v1075 = vmul.f32 %v1074, %v790
    %v1076 = vand.u32 2147483647, %v790
    %vm1077 = vcmp.lt.f32.partialorder %v1076, 0.0004427343
    %v1078 = vsel %vm1077, %v1075, %v1072
    %v1079 = vsel %vm663, %v505, %v799
    %v1080 = vsel %vm664, %v510, %v808
    %v1081 = vsel %vm665, %v515, %v817
    %v1082 = vsel %vm666, %v520, %v826
    %v1083 = vsel %vm667, %v525, %v835
    %v1084 = vsel %vm668, %v530, %v844
    %v1085 = vsel %vm669, %v535, %v853
    %v1086 = vsel %vm670, %v540, %v862
    %v1087 = vsel %vm671, %v545, %v871
    %v1088 = vsel %vm672, %v550, %v880
    %v1089 = vsel %vm673, %v555, %v889
    %v1090 = vsel %vm674, %v560, %v898
    %v1091 = vsel %vm675, %v565, %v907
    %v1092 = vsel %vm676, %v570, %v916
    %v1093 = vsel %vm677, %v575, %v925
    %v1094 = vsel %vm678, %v580, %v934
    %v1095 = vsel %vm679, %v585, %v943
    %v1096 = vsel %vm680, %v590, %v952
    %v1097 = vsel %vm681, %v595, %v961
    %v1098 = vsel %vm682, %v600, %v970
    %v1099 = vsel %vm683, %v605, %v979
    %v1100 = vsel %vm684, %v610, %v988
    %v1101 = vsel %vm685, %v615, %v997
    %v1102 = vsel %vm686, %v620, %v1006
    %v1103 = vsel %vm687, %v625, %v1015
    %v1104 = vsel %vm688, %v630, %v1024
    %v1105 = vsel %vm689, %v635, %v1033
    %v1106 = vsel %vm690, %v640, %v1042
    %v1107 = vsel %vm691, %v645, %v1051
    %v1108 = vsel %vm692, %v650, %v1060
    %v1109 = vsel %vm693, %v655, %v1069
    %v1110 = vsel %vm694, %v660, %v1078
    %s1111 = scalar_lea.vmem %s5, %s33
    %vm1112 = vcmask 7168
    %1113 = vst.msk [vmem:[%s1111] sm:$0xff] %vm1112, %v505
    %1114 = vst.msk [vmem:[%s1111 + $0x8] sm:$0xff] %vm1112, %v510
    %1115 = vst.msk [vmem:[%s1111 + $0x10] sm:$0xff] %vm1112, %v515
    %1116 = vst.msk [vmem:[%s1111 + $0x18] sm:$0xff] %vm1112, %v520
    %1117 = vst.msk [vmem:[%s1111 + $0x20] sm:$0xff] %vm1112, %v525
    %1118 = vst.msk [vmem:[%s1111 + $0x28] sm:$0xff] %vm1112, %v530
    %1119 = vst.msk [vmem:[%s1111 + $0x30] sm:$0xff] %vm1112, %v535
    %1120 = vst.msk [vmem:[%s1111 + $0x38] sm:$0xff] %vm1112, %v540
    %1121 = vst.msk [vmem:[%s1111 + $0x40] sm:$0xff] %vm1112, %v545
    %1122 = vst.msk [vmem:[%s1111 + $0x48] sm:$0xff] %vm1112, %v550
    %1123 = vst.msk [vmem:[%s1111 + $0x50] sm:$0xff] %vm1112, %v555
    %1124 = vst.msk [vmem:[%s1111 + $0x58] sm:$0xff] %vm1112, %v560
    %1125 = vst.msk [vmem:[%s1111 + $0x60] sm:$0xff] %vm1112, %v565
    %1126 = vst.msk [vmem:[%s1111 + $0x68] sm:$0xff] %vm1112, %v570
    %1127 = vst.msk [vmem:[%s1111 + $0x70] sm:$0xff] %vm1112, %v575
    %1128 = vst.msk [vmem:[%s1111 + $0x78] sm:$0xff] %vm1112, %v580
    %1129 = vst.msk [vmem:[%s1111 + $0x80] sm:$0xff] %vm1112, %v585
    %1130 = vst.msk [vmem:[%s1111 + $0x88] sm:$0xff] %vm1112, %v590
    %1131 = vst.msk [vmem:[%s1111 + $0x90] sm:$0xff] %vm1112, %v595
    %1132 = vst.msk [vmem:[%s1111 + $0x98] sm:$0xff] %vm1112, %v600
    %1133 = vst.msk [vmem:[%s1111 + $0xa0] sm:$0xff] %vm1112, %v605
    %1134 = vst.msk [vmem:[%s1111 + $0xa8] sm:$0xff] %vm1112, %v610
    %1135 = vst.msk [vmem:[%s1111 + $0xb0] sm:$0xff] %vm1112, %v615
    %1136 = vst.msk [vmem:[%s1111 + $0xb8] sm:$0xff] %vm1112, %v620
    %1137 = vst.msk [vmem:[%s1111 + $0xc0] sm:$0xff] %vm1112, %v625
    %1138 = vst.msk [vmem:[%s1111 + $0xc8] sm:$0xff] %vm1112, %v630
    %1139 = vst.msk [vmem:[%s1111 + $0xd0] sm:$0xff] %vm1112, %v635
    %1140 = vst.msk [vmem:[%s1111 + $0xd8] sm:$0xff] %vm1112, %v640
    %1141 = vst.msk [vmem:[%s1111 + $0xe0] sm:$0xff] %vm1112, %v645
    %1142 = vst.msk [vmem:[%s1111 + $0xe8] sm:$0xff] %vm1112, %v650
    %1143 = vst.msk [vmem:[%s1111 + $0xf0] sm:$0xff] %vm1112, %v655
    %1144 = vst.msk [vmem:[%s1111 + $0xf8] sm:$0xff] %vm1112, %v660
    %vm1145 = vcmask 15368
    %1146 = vst.msk [vmem:[%s1111] sm:$0xff] %vm1145, %v1079
    %1147 = vst.msk [vmem:[%s1111 + $0x8] sm:$0xff] %vm1145, %v1080
    %1148 = vst.msk [vmem:[%s1111 + $0x10] sm:$0xff] %vm1145, %v1081
    %1149 = vst.msk [vmem:[%s1111 + $0x18] sm:$0xff] %vm1145, %v1082
    %1150 = vst.msk [vmem:[%s1111 + $0x20] sm:$0xff] %vm1145, %v1083
    %1151 = vst.msk [vmem:[%s1111 + $0x28] sm:$0xff] %vm1145, %v1084
    %1152 = vst.msk [vmem:[%s1111 + $0x30] sm:$0xff] %vm1145, %v1085
    %1153 = vst.msk [vmem:[%s1111 + $0x38] sm:$0xff] %vm1145, %v1086
    %1154 = vst.msk [vmem:[%s1111 + $0x40] sm:$0xff] %vm1145, %v1087
    %1155 = vst.msk [vmem:[%s1111 + $0x48] sm:$0xff] %vm1145, %v1088
    %1156 = vst.msk [vmem:[%s1111 + $0x50] sm:$0xff] %vm1145, %v1089
    %1157 = vst.msk [vmem:[%s1111 + $0x58] sm:$0xff] %vm1145, %v1090
    %1158 = vst.msk [vmem:[%s1111 + $0x60] sm:$0xff] %vm1145, %v1091
    %1159 = vst.msk [vmem:[%s1111 + $0x68] sm:$0xff] %vm1145, %v1092
    %1160 = vst.msk [vmem:[%s1111 + $0x70] sm:$0xff] %vm1145, %v1093
    %1161 = vst.msk [vmem:[%s1111 + $0x78] sm:$0xff] %vm1145, %v1094
    %1162 = vst.msk [vmem:[%s1111 + $0x80] sm:$0xff] %vm1145, %v1095
    %1163 = vst.msk [vmem:[%s1111 + $0x88] sm:$0xff] %vm1145, %v1096
    %1164 = vst.msk [vmem:[%s1111 + $0x90] sm:$0xff] %vm1145, %v1097
    %1165 = vst.msk [vmem:[%s1111 + $0x98] sm:$0xff] %vm1145, %v1098
    %1166 = vst.msk [vmem:[%s1111 + $0xa0] sm:$0xff] %vm1145, %v1099
    %1167 = vst.msk [vmem:[%s1111 + $0xa8] sm:$0xff] %vm1145, %v1100
    %1168 = vst.msk [vmem:[%s1111 + $0xb0] sm:$0xff] %vm1145, %v1101
    %1169 = vst.msk [vmem:[%s1111 + $0xb8] sm:$0xff] %vm1145, %v1102
    %1170 = vst.msk [vmem:[%s1111 + $0xc0] sm:$0xff] %vm1145, %v1103
    %1171 = vst.msk [vmem:[%s1111 + $0xc8] sm:$0xff] %vm1145, %v1104
    %1172 = vst.msk [vmem:[%s1111 + $0xd0] sm:$0xff] %vm1145, %v1105
    %1173 = vst.msk [vmem:[%s1111 + $0xd8] sm:$0xff] %vm1145, %v1106
    %1174 = vst.msk [vmem:[%s1111 + $0xe0] sm:$0xff] %vm1145, %v1107
    %1175 = vst.msk [vmem:[%s1111 + $0xe8] sm:$0xff] %vm1145, %v1108
    %1176 = vst.msk [vmem:[%s1111 + $0xf0] sm:$0xff] %vm1145, %v1109
    %1177 = vst.msk [vmem:[%s1111 + $0xf8] sm:$0xff] %vm1145, %v1110
  $region26: #{tpu_custom_call.1} parent=0 // loop_footer
    %s32 = sadd.s32 1, %s28
  $region27: #{tpu_custom_call.1} parent=0 // loop_footer_branch
    %27 = sbr.rel target = $region23
  $region28: #{tpu_custom_call.1} parent=0 // loop_exit
    _
  // Predicated region
  $region29: #{tpu_custom_call.1} parent=0 // pred_check
    _
  $region30: #{tpu_custom_call.1} parent=0 // pred_check_branch
    %1179 = sbr.rel (0) target = $region32
  $region31: #{tpu_custom_call.1} parent=0 // pred_region
    _
  $region32: #{tpu_custom_call.1} parent=0 // pred_fallthru
    _
  // Predicated region
  $region33: #{tpu_custom_call.1} parent=0 // pred_check
    _
  $region34: #{tpu_custom_call.1} parent=0 // pred_check_branch
    %1181 = sbr.rel (0) target = $region36
  $region35: #{tpu_custom_call.1} parent=0 // pred_region
    _
  $region36: #{tpu_custom_call.1} parent=0 // pred_fallthru
    _

</llo_original>
